<compile_context>
chip_gen: v7x
topology: tpu7x:2x2x1
jax: 0.10.0
libtpu: 0.0.40
codegen_flags: <defaults>
</compile_context>

<pallas_src>
import functools
import math

import jax
import jax.numpy as jnp
from jax import lax
from jax.experimental import pallas as pl
from jax.experimental.pallas import tpu as pltpu


# Table is kept VMEM-resident (fast path) when it is at most this many bytes
# and the vocab is small enough that a one-hot matmul is cheap.
_VMEM_TABLE_MAX_BYTES = 2 * 1024 * 1024
_VMEM_TABLE_MAX_VOCAB = 4096


def _round_up(x: int, m: int) -> int:
    return ((x + m - 1) // m) * m


def _sublane_multiple(dtype) -> int:
    """Packed sublane tile for the dtype: 8 (4B), 16 (2B), 32 (1B)."""
    itemsize = jnp.dtype(dtype).itemsize
    return max(8, 32 // max(itemsize, 1))


# ----------------------------------------------------------------------------
# Fast path: table resident in VMEM, gather = one-hot MXU matmul
# ----------------------------------------------------------------------------
def _embeddings_onehot_kernel(ids_ref, table_ref, out_ref, *, scale):
    """ids_ref: (tb, 1) int32; table_ref: (vocab_pad, d_model) VMEM-resident."""
    ids = ids_ref[...]                                        # (tb, 1)
    tb = ids.shape[0]
    vocab_pad = table_ref.shape[0]
    iota = lax.broadcasted_iota(jnp.int32, (tb, vocab_pad), 1)
    one_hot = (iota == ids).astype(table_ref.dtype)           # (tb, vocab_pad)
    rows = jnp.dot(one_hot, table_ref[...],
                   preferred_element_type=jnp.float32)        # exact row select
    out_ref[...] = (rows * scale).astype(out_ref.dtype)


# ----------------------------------------------------------------------------
# General path: table in HBM, per-row DMA gather directly into the output tile
# ----------------------------------------------------------------------------
def _embeddings_dma_kernel(ids_smem, table_hbm, out_ref, sem, *, scale,
                           token_block):
    """ids_smem: (n_pad,) int32 in SMEM (scalar prefetch).
    table_hbm : (vocab, d_model) ref left in HBM (memory_space=pl.ANY).
    out_ref   : (token_block, d_model) VMEM output block (DMA destination).
    sem       : (1,) shared DMA semaphore for all rows of the block.
    """
    base = pl.program_id(0) * token_block

    # Issue all row gathers (and all SMEM id reads) before any wait so the
    # HBM fetches overlap each other.
    def issue(r, carry):
        tok = ids_smem[base + r]
        pltpu.make_async_copy(
            table_hbm.at[pl.ds(tok, 1), :],      # (1, d_model) HBM row
            out_ref.at[pl.ds(r, 1), :],          # directly into the output tile
            sem.at[0],
        ).start()
        return carry

    lax.fori_loop(0, token_block, issue, 0, unroll=8)

    # Drain: one wait per row-sized transfer on the shared semaphore
    # (all copies have identical shape, so completion order is irrelevant).
    def drain(r, carry):
        pltpu.make_async_copy(
            table_hbm.at[pl.ds(0, 1), :],
            out_ref.at[pl.ds(0, 1), :],
            sem.at[0],
        ).wait()
        return carry

    lax.fori_loop(0, token_block, drain, 0, unroll=8)

    # Fused epilogue: scale in place, single full-block lane-dense store.
    out_ref[...] = (out_ref[...] * scale).astype(out_ref.dtype)


# ----------------------------------------------------------------------------
# Wrapper
# ----------------------------------------------------------------------------
def embeddings_forward(token_ids, table, *, token_block=128):
    """JAX/Pallas equivalent of Embeddings.forward: table[token_ids] * sqrt(d)."""
    vocab, d_model = table.shape
    scale = math.sqrt(d_model)
    out_dtype = table.dtype

    ids = token_ids.reshape(-1).astype(jnp.int32)
    # nn.Embedding requires 0 <= id < vocab; clamp so an invalid id can never
    # drive an out-of-bounds DMA (identical result for valid inputs).
    ids = jnp.clip(ids, 0, vocab - 1)
    n = ids.shape[0]

    # Block size: multiple of the dtype's packed sublane tile, no larger than
    # needed for tiny inputs.
    align = _sublane_multiple(out_dtype)
    tb = max(align, _round_up(min(token_block, max(n, 1)), align))
    n_pad = _round_up(n, tb)
    if n_pad != n:
        ids = jnp.pad(ids, (0, n_pad - n))       # pad with token 0, sliced off
    grid = (n_pad // tb,)

    table_bytes = vocab * d_model * jnp.dtype(table.dtype).itemsize
    use_vmem_table = (table_bytes <= _VMEM_TABLE_MAX_BYTES
                      and vocab <= _VMEM_TABLE_MAX_VOCAB)

    compiler_params = pltpu.CompilerParams(
        dimension_semantics=("parallel",),        # independent token blocks
        vmem_limit_bytes=32 * 1024 * 1024,        # safe on v5e/v6e/v7x
    )

    if use_vmem_table:
        # Pad vocab to a lane-aligned contraction dim; padded rows are zero and
        # never selected (ids < vocab), so the one-hot matmul stays exact.
        vocab_pad = _round_up(vocab, 128)
        table_p = table
        if vocab_pad != vocab:
            table_p = jnp.pad(table, ((0, vocab_pad - vocab), (0, 0)))

        out = pl.pallas_call(
            functools.partial(_embeddings_onehot_kernel, scale=scale),
            out_shape=jax.ShapeDtypeStruct((n_pad, d_model), out_dtype),
            grid_spec=pl.GridSpec(
                grid=grid,
                in_specs=[
                    pl.BlockSpec((tb, 1), lambda i: (i, 0)),
                    # Constant index_map -> table loaded once, stays resident.
                    pl.BlockSpec((vocab_pad, d_model), lambda i: (0, 0)),
                ],
                out_specs=pl.BlockSpec((tb, d_model), lambda i: (i, 0)),
            ),
            compiler_params=compiler_params,
        )(ids.reshape(n_pad, 1), table_p)
    else:
        out = pl.pallas_call(
            functools.partial(_embeddings_dma_kernel, scale=scale,
                              token_block=tb),
            out_shape=jax.ShapeDtypeStruct((n_pad, d_model), out_dtype),
            grid_spec=pltpu.PrefetchScalarGridSpec(
                num_scalar_prefetch=1,                         # ids -> SMEM
                grid=grid,
                in_specs=[pl.BlockSpec(memory_space=pl.ANY)],  # table in HBM
                out_specs=pl.BlockSpec((tb, d_model),
                                       lambda i, ids_ref: (i, 0)),
                scratch_shapes=[pltpu.SemaphoreType.DMA((1,))],
            ),
            compiler_params=compiler_params,
        )(ids, table)

    return out[:n].reshape(*token_ids.shape, d_model)


# ----------------------------------------------------------------------------
# Demo / self-check
# ----------------------------------------------------------------------------
if __name__ == "__main__":
    key = jax.random.PRNGKey(0)
    k_ids, k_tab, k_ids2, k_tab2 = jax.random.split(key, 4)

    # --- small vocab: exercises the VMEM-resident-table fast path ----------
    B, S = 2, 8
    VOCAB, D_MODEL = 97, 128
    token_ids = jax.random.randint(k_ids, (B, S), 0, VOCAB, dtype=jnp.int32)
    table = jax.random.normal(k_tab, (VOCAB, D_MODEL), jnp.float32) * 0.02

    out = jax.block_until_ready(embeddings_forward(token_ids, table))
    ref = jnp.take(table, token_ids, axis=0) * math.sqrt(D_MODEL)
    assert out.shape == (B, S, D_MODEL) and out.dtype == jnp.float32
    assert jnp.allclose(out, ref, atol=1e-5, rtol=1e-5)

    # --- larger vocab: exercises the HBM per-row DMA gather path -----------
    B2, S2 = 4, 64
    VOCAB2, D_MODEL2 = 4099, 128
    token_ids2 = jax.random.randint(k_ids2, (B2, S2), 0, VOCAB2, dtype=jnp.int32)
    table2 = jax.random.normal(k_tab2, (VOCAB2, D_MODEL2), jnp.float32) * 0.02

    out2 = jax.block_until_ready(embeddings_forward(token_ids2, table2))
    ref2 = jnp.take(table2, token_ids2, axis=0) * math.sqrt(D_MODEL2)
    assert out2.shape == (B2, S2, D_MODEL2) and out2.dtype == jnp.float32
    assert jnp.allclose(out2, ref2, atol=1e-5, rtol=1e-5)

    print("KERNEL_OK")
</pallas_src>

<mosaic_0001>
module attributes {stable_mosaic.version = 11 : i64} {
  func.func @_embeddings_onehot_kernel(%arg0: i32, %arg1: memref<16x1xi32, #tpu.memory_space<vmem>>, %arg2: memref<128x128xf32, #tpu.memory_space<vmem>>, %arg3: memref<16x128xf32, #tpu.memory_space<vmem>>) attributes {dimension_semantics = [#tpu.dimension_semantics<parallel>], iteration_bounds = array<i64: 1>, scalar_prefetch = 0 : i64, scratch_operands = 0 : i64, tpu.core_type = #tpu.core_type<tc>, window_params = [{transform_indices = @transform_0, window_bounds = array<i64: 16, 1>}, {pipeline_mode = #tpu.pipeline_mode<synchronous>, transform_indices = @transform_1, window_bounds = array<i64: 128, 128>}, {transform_indices = @transform_2, window_bounds = array<i64: 16, 128>}]} {
    %c0 = arith.constant 0 : index
    %c0_0 = arith.constant 0 : index
    %0 = vector.load %arg1[%c0, %c0_0] : memref<16x1xi32, #tpu.memory_space<vmem>>, vector<16x1xi32>
    %1 = tpu.iota {dimensions = array<i32: 1>} : vector<16x128xi32>
    %2 = vector.broadcast %0 : vector<16x1xi32> to vector<16x128xi32>
    %3 = arith.cmpi eq, %1, %2 : vector<16x128xi32>
    %4 = arith.extui %3 : vector<16x128xi1> to vector<16x128xi32>
    %5 = arith.sitofp %4 : vector<16x128xi32> to vector<16x128xf32>
    %c0_1 = arith.constant 0 : index
    %c0_2 = arith.constant 0 : index
    %6 = vector.load %arg2[%c0_1, %c0_2] : memref<128x128xf32, #tpu.memory_space<vmem>>, vector<128x128xf32>
    %cst = arith.constant dense<0.000000e+00> : vector<16x128xf32>
    %7 = tpu.matmul %5, %6, %cst {dimension_numbers = #tpu.dot_dimension_numbers<[1], [0], [0], [1], [0, 0, 1, 1], [], []>} : vector<16x128xf32>, vector<128x128xf32>, vector<16x128xf32> -> vector<16x128xf32>
    %cst_3 = arith.constant 11.3137083 : f32
    %8 = vector.broadcast %cst_3 : f32 to vector<16x128xf32>
    %9 = arith.mulf %7, %8 : vector<16x128xf32>
    %c0_4 = arith.constant 0 : index
    %c0_5 = arith.constant 0 : index
    %10 = vector.load %arg3[%c0_4, %c0_5] : memref<16x128xf32, #tpu.memory_space<vmem>>, vector<16x128xf32>
    tpu.vector_store %arg3[%c0_4, %c0_5], %9 {strides = array<i32>} : memref<16x128xf32, #tpu.memory_space<vmem>>, vector<16x128xf32>,
    return
  }
  func.func @transform_0(%arg0: i32) -> (i32, i32) {
    %c0_i32 = arith.constant 0 : i32
    %c0_i32_0 = arith.constant 0 : i32
    return %arg0, %c0_i32 : i32, i32
  }
  func.func @transform_1(%arg0: i32) -> (i32, i32) {
    %c0_i32 = arith.constant 0 : i32
    %c0_i32_0 = arith.constant 0 : i32
    %c0_i32_1 = arith.constant 0 : i32
    return %c0_i32, %c0_i32_0 : i32, i32
  }
  func.func @transform_2(%arg0: i32) -> (i32, i32) {
    %c0_i32 = arith.constant 0 : i32
    %c0_i32_0 = arith.constant 0 : i32
    return %arg0, %c0_i32 : i32, i32
  }
}

</mosaic_0001>

<llo_original>
// kernel: tpu_custom_call.1
$region0: #{tpu_custom_call.1}
  #allocation0 [shape = 'u32[]', space=smem, size = 0x4, offset = 0x4, fixed_abs, tag = 'smem constant byte address 0x4 - core index']
  #allocation1 [shape = 'u32[144,128]{1,0:T(1,128)}', space=vmem, size = 0x12000, scoped, tag = 'internal scratch']
  %s0 = inlined_call_operand.vmem [shape: s32[16,1], index: 0, kind: input, shape index: {}]
  %s1 = inlined_call_operand.hbm [shape: f32[128,128], index: 1, kind: input, shape index: {}]
  %s2 = inlined_call_operand.hbm [shape: f32[16,128], index: 2, kind: output, shape index: {}]
  %s3 = sld [smem:[#allocation0]]
  $region22: #{tpu_custom_call.1} parent=0
    _
  %s5 = ssub.s32 1, %s3
  %s6 = scalar_select 0, %s5, %s3
  $region1: #{tpu_custom_call.1} parent=0
    #allocation2 [shape = 'u8[65536]{0}', space=vmem, size = 0x10000, scoped, tag = 'input window, operand 1, single buffered']
    #allocation3 [shape = 's32[1]{0}', space=sflag, size = 0x4, scoped, tag = 'scoped memory for tpu_custom_call.1']
    #allocation4 [shape = 's32[1]{0}', space=sflag, size = 0x4, scoped, tag = 'scoped memory for tpu_custom_call.1']
    #allocation5 [shape = 'u8[8192]{0}', space=vmem, size = 0x2000, scoped, tag = 'output window, operand 0, single buffered']
    %7 = vsyncpa [#allocation3], 0
    %8 = vsyncpa [#allocation4], 0
    // Predicated region
    $region2: #{tpu_custom_call.1} parent=1 // pred_check
      _
    $region3: #{tpu_custom_call.1} parent=1 // pred_check_branch
      %10 = sbr.rel (0) target = $region5
    $region4: #{tpu_custom_call.1} parent=1 // pred_region
      _
    $region5: #{tpu_custom_call.1} parent=1 // pred_fallthru
      _
    // Predicated region
    $region6: #{tpu_custom_call.1} parent=1 // pred_check
      _
    $region7: #{tpu_custom_call.1} parent=1 // pred_check_branch
      %12 = sbr.rel (0) target = $region9
    $region8: #{tpu_custom_call.1} parent=1 // pred_region
      %s14 = ssub.s32 2048, 2048
      %15 = vsyncadd [#allocation3], %s14
      %s16 = sshll.u32 [#allocation2], 4
      %s17 = int_to_ptr.vmem [resolvable:$true] %s16
      %22 = dma.hbm_to_vmem [thread:$0]  %s1, 2048, %s17, [#allocation3], 128, 128, 8
    $region9: #{tpu_custom_call.1} parent=1 // pred_fallthru
      _
    // Predicated region
    $region10: #{tpu_custom_call.1} parent=1 // pred_check
      _
    $region11: #{tpu_custom_call.1} parent=1 // pred_check_branch
      %24 = sbr.rel (0) target = $region13
    $region12: #{tpu_custom_call.1} parent=1 // pred_region
      %25 = dma.done [#allocation3], 2048
    $region13: #{tpu_custom_call.1} parent=1 // pred_fallthru
      _
    %v26 = vld [vmem:[%s0] sm:$0xff]
    %v27 = vld [vmem:[%s0 + $0x8] sm:$0xff]
    %v28 = vlaneseq
    %v29 = vand.u32 %v28, 127
    %30 = vset.pattern.permute.xlu0 0
    %31 = vperm.xlu0 %30, %v26
    %v32 = vpop.permute.xlu0 %31
    %33 = vset.pattern.permute.xlu0 0
    %34 = vperm.xlu0 %33, %v27
    %v35 = vpop.permute.xlu0 %34
    %vm36 = vcmp.eq.s32.totalorder %v29, %v32
    %vm37 = vcmp.eq.s32.totalorder %v29, %v35
    %v38 = vsel %vm36, 1, 0
    %v39 = vsel %vm37, 1, 0
    %v40 = vcvt.s32.f32 %v38
    %v41 = vcvt.s32.f32 %v39
    %v42 = vld [vmem:[#allocation2] sm:$0xff]
    %v43 = vld [vmem:[#allocation2 + $0x8] sm:$0xff]
    %v44 = vld [vmem:[#allocation2 + $0x10] sm:$0xff]
    %v45 = vld [vmem:[#allocation2 + $0x18] sm:$0xff]
    %v46 = vld [vmem:[#allocation2 + $0x20] sm:$0xff]
    %v47 = vld [vmem:[#allocation2 + $0x28] sm:$0xff]
    %v48 = vld [vmem:[#allocation2 + $0x30] sm:$0xff]
    %v49 = vld [vmem:[#allocation2 + $0x38] sm:$0xff]
    %v50 = vld [vmem:[#allocation2 + $0x40] sm:$0xff]
    %v51 = vld [vmem:[#allocation2 + $0x48] sm:$0xff]
    %v52 = vld [vmem:[#allocation2 + $0x50] sm:$0xff]
    %v53 = vld [vmem:[#allocation2 + $0x58] sm:$0xff]
    %v54 = vld [vmem:[#allocation2 + $0x60] sm:$0xff]
    %v55 = vld [vmem:[#allocation2 + $0x68] sm:$0xff]
    %v56 = vld [vmem:[#allocation2 + $0x70] sm:$0xff]
    %v57 = vld [vmem:[#allocation2 + $0x78] sm:$0xff]
    %58 = vmatprep.subr.mxu0 0.0
    %59 = vmatpush1.msra.mxu0 %v42
    %60 = vmatprep.subr.mxu0 0.0
    %61 = vmatpush1.msra.mxu0 %v43
    %62 = vmatprep.subr.mxu0 0.0
    %63 = vmatpush1.msra.mxu0 %v44
    %64 = vmatprep.subr.mxu0 0.0
    %65 = vmatpush1.msra.mxu0 %v45
    %66 = vmatprep.subr.mxu0 0.0
    %67 = vmatpush1.msra.mxu0 %v46
    %68 = vmatprep.subr.mxu0 0.0
    %69 = vmatpush1.msra.mxu0 %v47
    %70 = vmatprep.subr.mxu0 0.0
    %71 = vmatpush1.msra.mxu0 %v48
    %72 = vmatprep.subr.mxu0 0.0
    %73 = vmatpush1.msra.mxu0 %v49
    %74 = vmatprep.subr.mxu0 0.0
    %75 = vmatpush1.msra.mxu0 %v50
    %76 = vmatprep.subr.mxu0 0.0
    %77 = vmatpush1.msra.mxu0 %v51
    %78 = vmatprep.subr.mxu0 0.0
    %79 = vmatpush1.msra.mxu0 %v52
    %80 = vmatprep.subr.mxu0 0.0
    %81 = vmatpush1.msra.mxu0 %v53
    %82 = vmatprep.subr.mxu0 0.0
    %83 = vmatpush1.msra.mxu0 %v54
    %84 = vmatprep.subr.mxu0 0.0
    %85 = vmatpush1.msra.mxu0 %v55
    %86 = vmatprep.subr.mxu0 0.0
    %87 = vmatpush1.msra.mxu0 %v56
    %88 = vmatprep.subr.mxu0 0.0
    %89 = vmatpush1.msra.mxu0 %v57
    %90 = vmatprep.subr.mxu0 0.0
    %91 = vmatpush1.msra.mxu0 0.0
    %92 = vmatprep.subr.mxu0 0.0
    %93 = vmatpush1.msra.mxu0 0.0
    %94 = vmatprep.subr.mxu0 0.0
    %95 = vmatpush1.msra.mxu0 0.0
    %96 = vmatprep.subr.mxu0 0.0
    %97 = vmatpush1.msra.mxu0 0.0
    %98 = vmatprep.subr.mxu0 0.0
    %99 = vmatpush1.msra.mxu0 0.0
    %100 = vmatprep.subr.mxu0 0.0
    %101 = vmatpush1.msra.mxu0 0.0
    %102 = vmatprep.subr.mxu0 0.0
    %103 = vmatpush1.msra.mxu0 0.0
    %104 = vmatprep.subr.mxu0 0.0
    %105 = vmatpush1.msra.mxu0 0.0
    %106 = vmatprep.subr.mxu0 0.0
    %107 = vmatpush1.msra.mxu0 0.0
    %108 = vmatprep.subr.mxu0 0.0
    %109 = vmatpush1.msra.mxu0 0.0
    %110 = vmatprep.subr.mxu0 0.0
    %111 = vmatpush1.msra.mxu0 0.0
    %112 = vmatprep.subr.mxu0 0.0
    %113 = vmatpush1.msra.mxu0 0.0
    %114 = vmatprep.subr.mxu0 0.0
    %115 = vmatpush1.msra.mxu0 0.0
    %116 = vmatprep.subr.mxu0 0.0
    %117 = vmatpush1.msra.mxu0 0.0
    %118 = vmatprep.subr.mxu0 0.0
    %119 = vmatpush1.msra.mxu0 0.0
    %120 = vmatprep.subr.mxu0 0.0
    %121 = vmatpush1.msra.mxu0 0.0
    %122 = vmatprep.mubr.f32.mxu0 0.0
    %123 = vmatmul.mubr.f32.gmra.mrb[0].mxu0 %v40
    %v124 = vpop.f32.mrb[0].mxu0
    %v125 = vadd.f32 0.0, %v124
    %v126 = vpop.f32.mrb[0].mxu0
    %127 = vmatprep.mubr.f32.mxu0 0.0
    %128 = vmatmul.mubr.f32.gmra.mrb[0].mxu0 %v41
    %v129 = vpop.f32.mrb[0].mxu0
    %v130 = vadd.f32 0.0, %v129
    %v131 = vpop.f32.mrb[0].mxu0
    %132 = vdwg.mxu0
    %v133 = vmul.f32 %v125, 11.313708
    %v134 = vmul.f32 %v130, 11.313708
    %135 = vst [vmem:[#allocation5] sm:$0xff] %v133
    %136 = vst [vmem:[#allocation5 + $0x8] sm:$0xff] %v134
    // Predicated region
    $region14: #{tpu_custom_call.1} parent=1 // pred_check
      _
    $region15: #{tpu_custom_call.1} parent=1 // pred_check_branch
      %138 = sbr.rel (0) target = $region17
    $region16: #{tpu_custom_call.1} parent=1 // pred_region
      %s140 = ssub.s32 256, 256
      %141 = vsyncadd [#allocation4], %s140
      %s142 = sshll.u32 [#allocation5], 4
      %s143 = int_to_ptr.vmem [resolvable:$true] %s142
      %148 = dma.vmem_to_hbm [thread:$0]  %s143, 256, %s2, [#allocation4], 128, 128, 8
    $region17: #{tpu_custom_call.1} parent=1 // pred_fallthru
      _
    // Predicated region
    $region18: #{tpu_custom_call.1} parent=1 // pred_check
      _
    $region19: #{tpu_custom_call.1} parent=1 // pred_check_branch
      %150 = sbr.rel (0) target = $region21
    $region20: #{tpu_custom_call.1} parent=1 // pred_region
      %151 = dma.done [#allocation4], 256
    $region21: #{tpu_custom_call.1} parent=1 // pred_fallthru
      _
    %152 = vsyncpa [#allocation3], 1
    %153 = vsyncpa [#allocation4], 1

</llo_original>
